<compile_context>
chip_gen: v6e
topology: v6e:2x2x1
jax: 0.10.0
libtpu: 0.0.40
codegen_flags: <defaults>
</compile_context>

<pallas_src>
import functools

import jax
import jax.numpy as jnp
from jax.experimental import pallas as pl
from jax.experimental.pallas import tpu as pltpu

_LANES = 128
_SUBLANES = 8


def _round_up(v, m):
    return (v + m - 1) // m * m


def _vmem_capacity_bytes():
    try:
        return int(pltpu.get_tpu_info().vmem_capacity_bytes)
    except Exception:
        return 128 * 1024 * 1024  # v5e/v6e default if the query is unavailable


def _pick_tile_n(n, c, itemsize, n_tensor_inputs, buf_budget_bytes,
                 target_block_bytes=4 * 1024 * 1024):
    """Byte-based row-tile selection (no hard row cap).

    Hard cap: pipelined input blocks (x2 buffers each) + in-kernel f32
    temporaries (~3 live (tile_n, C) f32 arrays: upcasts, exp / diff) must fit
    in `buf_budget_bytes`.
    Soft target: ~4 MiB per single (tile_n, C) input block so the ~0.35 us
    per-grid-step overhead amortizes away.
    """
    per_row_vmem = n_tensor_inputs * 2 * c * itemsize + 3 * c * 4
    tile_cap = max(8, buf_budget_bytes // per_row_vmem)
    tile_target = max(8, target_block_bytes // max(1, c * itemsize))
    tile = int(min(tile_cap, tile_target))
    tile = max(8, (tile // 8) * 8)               # sublane multiple
    return min(tile, _round_up(n, 8))            # never larger than the problem


def _ce_sum(x, y, valid):
    """Partial sum of per-row cross-entropy for one (tile_n, C) f32 block.

    valid: None (full block, no masking traced) or (tile_n, 1) bool mask.
    Per-row math stays within rows, so garbage padded rows can't contaminate
    valid rows; jnp.where keeps any NaN/Inf they produce out of the sum.
    """
    tn, c = x.shape
    m = jnp.max(x, axis=-1, keepdims=True)
    lse = m + jnp.log(jnp.sum(jnp.exp(x - m), axis=-1, keepdims=True))      # (tn, 1)
    col = jax.lax.broadcasted_iota(jnp.int32, (tn, c), 1)
    # single select instead of one-hot (astype + multiply): ~2 fewer VALU ops/elem
    x_at_y = jnp.sum(jnp.where(col == y, x, 0.0), axis=-1, keepdims=True)   # (tn, 1)
    ce_per_row = lse - x_at_y
    if valid is not None:
        ce_per_row = jnp.where(valid, ce_per_row, 0.0)                      # NaN-safe mask
    return jnp.sum(ce_per_row)


def _mse_sum(x, lg, valid):
    diff = x - lg
    if valid is not None:
        diff = jnp.where(valid, diff, 0.0)       # mask before squaring (Inf-safe)
    return jnp.sum(diff * diff)


def _pack_tile(ce, mse):
    """ce at [0, 0], mse at [0, 1] of a full (8, 128) vreg tile (zeros elsewhere)."""
    sub = jax.lax.broadcasted_iota(jnp.int32, (_SUBLANES, _LANES), 0)
    lane = jax.lax.broadcasted_iota(jnp.int32, (_SUBLANES, _LANES), 1)
    row0 = sub == 0
    return jnp.where(row0 & (lane == 0), ce,
                     jnp.where(row0 & (lane == 1), mse, 0.0)).astype(jnp.float32)


def _ce_mse_kernel(x_ref, y_ref, logits_ref, out_ref, *, n_valid, tile_n, ragged):
    x = x_ref[...].astype(jnp.float32)           # native dtype -> f32 in-kernel
    y = y_ref[...]                               # (tile_n, 1) int32
    lg = logits_ref[...].astype(jnp.float32)

    def emit(valid):
        ce = _ce_sum(x, y, valid)
        mse = _mse_sum(x, lg, valid)
        out_ref[...] = _pack_tile(ce, mse)[None]

    if not ragged:
        emit(None)                               # steady state: zero masking ops
    else:
        i = pl.program_id(0)
        last = pl.num_programs(0) - 1

        @pl.when(i != last)
        def _():
            emit(None)                           # full blocks stay unmasked

        @pl.when(i == last)
        def _():
            row = jax.lax.broadcasted_iota(jnp.int32, (tile_n, 1), 0) + i * tile_n
            emit(row < n_valid)                  # only the overhanging block masks


def _ce_only_kernel(x_ref, y_ref, out_ref, *, n_valid, tile_n, ragged):
    x = x_ref[...].astype(jnp.float32)
    y = y_ref[...]

    def emit(valid):
        out_ref[...] = _pack_tile(_ce_sum(x, y, valid), 0.0)[None]

    if not ragged:
        emit(None)
    else:
        i = pl.program_id(0)
        last = pl.num_programs(0) - 1

        @pl.when(i != last)
        def _():
            emit(None)

        @pl.when(i == last)
        def _():
            row = jax.lax.broadcasted_iota(jnp.int32, (tile_n, 1), 0) + i * tile_n
            emit(row < n_valid)


def complied_loss(x, y, logits=None, *, ce_factor=1.0, mse_factor=0.5,
                  reduction="mean", tile_n=None):
    """Pallas implementation of CompliedLoss.forward (kd_mode='mse')."""
    assert reduction in ("mean", "sum")
    # TODO(synk): reduction='none' (per-sample loss vector) not implemented.
    # TODO(synk): torch CrossEntropyLoss ignore_index=-100 rows are not skipped.
    # TODO(synk): kd_mode='ce' (KDCrossEntropyLoss soft-target path) not implemented.
    # TODO(synk): very large C (LLM vocab) would need a second grid axis over C
    #             with an online logsumexp; not needed at these shapes.
    # TODO(synk): for production C < 128, fold k = 128 // C rows into the lane
    #             axis (segmented reductions) to fill vregs; for now the byte-based
    #             tile heuristic just grows TILE_N for small C.
    n, c = x.shape
    use_logits = (mse_factor > 0) and (logits is not None)

    y2 = y.reshape(n, 1).astype(jnp.int32)
    itemsize = jnp.dtype(x.dtype).itemsize
    n_tensor_inputs = 2 if use_logits else 1

    # Generation-aware VMEM budgeting (v7x has 64 MiB/TC; v5e/v6e have 128 MiB).
    vmem_cap = _vmem_capacity_bytes()
    if vmem_cap <= 64 * 1024 * 1024:
        vmem_limit = 40 * 1024 * 1024
        buf_budget = 14 * 1024 * 1024
    else:
        vmem_limit = 64 * 1024 * 1024
        buf_budget = 24 * 1024 * 1024

    if tile_n is None:
        tile_n = _pick_tile_n(n, c, itemsize, n_tensor_inputs, buf_budget)
    else:
        tile_n = max(8, (int(tile_n) // 8) * 8)
    num_blocks = pl.cdiv(n, tile_n)
    ragged = (n % tile_n) != 0

    # Full-vreg output blocks: ce at [b, 0, 0], mse at [b, 0, 1].
    out_shape = jax.ShapeDtypeStruct((num_blocks, _SUBLANES, _LANES), jnp.float32)
    out_spec = pl.BlockSpec((1, _SUBLANES, _LANES), lambda i: (i, 0, 0))
    compiler_params = pltpu.CompilerParams(
        dimension_semantics=("parallel",),        # shards blocks over both TCs on v7x
        vmem_limit_bytes=vmem_limit,
    )
    cost = pl.CostEstimate(
        flops=(9 if use_logits else 6) * n * c,
        transcendentals=n * c + n,                # exp per element + log per row
        bytes_accessed=(n_tensor_inputs * n * c * itemsize + n * 4
                        + num_blocks * _SUBLANES * _LANES * 4),
    )

    if use_logits:
        kernel = functools.partial(_ce_mse_kernel, n_valid=n, tile_n=tile_n,
                                   ragged=ragged)
        partials = pl.pallas_call(
            kernel,
            out_shape=out_shape,
            grid=(num_blocks,),
            in_specs=[
                pl.BlockSpec((tile_n, c), lambda i: (i, 0)),
                pl.BlockSpec((tile_n, 1), lambda i: (i, 0)),
                pl.BlockSpec((tile_n, c), lambda i: (i, 0)),
            ],
            out_specs=out_spec,
            compiler_params=compiler_params,
            cost_estimate=cost,
        )(x, y2, logits)          # native dtypes; no wrapper-side f32 upcast
    else:
        kernel = functools.partial(_ce_only_kernel, n_valid=n, tile_n=tile_n,
                                   ragged=ragged)
        partials = pl.pallas_call(
            kernel,
            out_shape=out_shape,
            grid=(num_blocks,),
            in_specs=[
                pl.BlockSpec((tile_n, c), lambda i: (i, 0)),
                pl.BlockSpec((tile_n, 1), lambda i: (i, 0)),
            ],
            out_specs=out_spec,
            compiler_params=compiler_params,
            cost_estimate=cost,
        )(x, y2)

    # Tiny final reductions (outside the kernel), normalized by the TRUE n / n*c.
    ce_sum = jnp.sum(partials[:, 0, 0])
    ce = ce_sum / n if reduction == "mean" else ce_sum
    loss_c = ce_factor * ce
    if use_logits:
        mse_sum = jnp.sum(partials[:, 0, 1])
        mse = mse_sum / (n * c) if reduction == "mean" else mse_sum
        return ce_factor * loss_c + mse_factor * mse
    return ce_factor * loss_c


def _reference(x, y, logits, ce_factor, mse_factor, reduction="mean"):
    # Pure-JAX reference mirroring torch semantics (including double ce_factor).
    x = x.astype(jnp.float32)
    lse = jax.nn.logsumexp(x, axis=-1)
    ce_per = lse - jnp.take_along_axis(x, y[:, None].astype(jnp.int32), axis=-1)[:, 0]
    ce = jnp.mean(ce_per) if reduction == "mean" else jnp.sum(ce_per)
    loss_c = ce_factor * ce
    if mse_factor > 0 and logits is not None:
        d = x - logits.astype(jnp.float32)
        mse = jnp.mean(d * d) if reduction == "mean" else jnp.sum(d * d)
        return ce_factor * loss_c + mse_factor * mse
    return ce_factor * loss_c


if __name__ == "__main__":
    key = jax.random.PRNGKey(0)
    kx, ky, kl = jax.random.split(key, 3)

    N, C = 8, 32
    ce_factor, mse_factor = 1.0, 0.5

    # --- f32, single block, CE + MSE ---
    x = jax.random.normal(kx, (N, C), dtype=jnp.float32)
    y = jax.random.randint(ky, (N,), 0, C, dtype=jnp.int32)
    logits = jax.random.normal(kl, (N, C), dtype=jnp.float32)

    out = complied_loss(x, y, logits, ce_factor=ce_factor,
                        mse_factor=mse_factor, reduction="mean")
    out = jax.block_until_ready(out)
    ref = _reference(x, y, logits, ce_factor, mse_factor, "mean")
    assert jnp.allclose(out, ref, rtol=1e-5, atol=1e-5), (out, ref)

    # --- CE-only path (no logits DMA at all), multi-block grid, ragged tail ---
    N2 = 20
    x2 = jax.random.normal(kx, (N2, C), dtype=jnp.float32)
    y2 = jax.random.randint(ky, (N2,), 0, C, dtype=jnp.int32)
    out2 = complied_loss(x2, y2, None, ce_factor=ce_factor, mse_factor=0.0,
                         reduction="sum", tile_n=8)
    out2 = jax.block_until_ready(out2)
    ref2 = _reference(x2, y2, None, ce_factor, 0.0, "sum")
    assert jnp.allclose(out2, ref2, rtol=1e-5, atol=1e-5), (out2, ref2)

    # --- CE + MSE, multi-block, non-divisible N, mean reduction ---
    N3 = 20
    x3 = jax.random.normal(kl, (N3, C), dtype=jnp.float32)
    y3 = jax.random.randint(ky, (N3,), 0, C, dtype=jnp.int32)
    l3 = jax.random.normal(kx, (N3, C), dtype=jnp.float32)
    out3 = complied_loss(x3, y3, l3, ce_factor=2.0, mse_factor=0.25,
                         reduction="mean", tile_n=8)
    out3 = jax.block_until_ready(out3)
    ref3 = _reference(x3, y3, l3, 2.0, 0.25, "mean")
    assert jnp.allclose(out3, ref3, rtol=1e-5, atol=1e-5), (out3, ref3)

    # --- bf16 inputs pass through natively (no wrapper-side f32 upcast) ---
    xb = x.astype(jnp.bfloat16)
    lb = logits.astype(jnp.bfloat16)
    outb = complied_loss(xb, y, lb, ce_factor=ce_factor,
                         mse_factor=mse_factor, reduction="mean")
    outb = jax.block_until_ready(outb)
    refb = _reference(xb, y, lb, ce_factor, mse_factor, "mean")
    assert jnp.allclose(outb, refb, rtol=1e-4, atol=1e-4), (outb, refb)

    print("KERNEL_OK")
</pallas_src>

<mosaic_0001>
module attributes {stable_mosaic.version = 11 : i64} {
  func.func @_ce_mse_kernel(%arg0: i32, %arg1: memref<8x32xf32, #tpu.memory_space<vmem>>, %arg2: memref<8x1xi32, #tpu.memory_space<vmem>>, %arg3: memref<8x32xf32, #tpu.memory_space<vmem>>, %arg4: memref<1x8x128xf32, #tpu.memory_space<vmem>>) attributes {dimension_semantics = [#tpu.dimension_semantics<parallel>], iteration_bounds = array<i64: 1>, scalar_prefetch = 0 : i64, scratch_operands = 0 : i64, tpu.core_type = #tpu.core_type<tc>, window_params = [{transform_indices = @transform_0, window_bounds = array<i64: 8, 32>}, {transform_indices = @transform_1, window_bounds = array<i64: 8, 1>}, {transform_indices = @transform_2, window_bounds = array<i64: 8, 32>}, {transform_indices = @transform_3, window_bounds = array<i64: 1, 8, 128>}]} {
    %c0 = arith.constant 0 : index
    %c0_0 = arith.constant 0 : index
    %0 = vector.load %arg1[%c0, %c0_0] : memref<8x32xf32, #tpu.memory_space<vmem>>, vector<8x32xf32>
    %c0_1 = arith.constant 0 : index
    %c0_2 = arith.constant 0 : index
    %1 = vector.load %arg2[%c0_1, %c0_2] : memref<8x1xi32, #tpu.memory_space<vmem>>, vector<8x1xi32>
    %c0_3 = arith.constant 0 : index
    %c0_4 = arith.constant 0 : index
    %2 = vector.load %arg3[%c0_3, %c0_4] : memref<8x32xf32, #tpu.memory_space<vmem>>, vector<8x32xf32>
    %cst = arith.constant dense<0xFF800000> : vector<8xf32>
    %3 = vector.multi_reduction <maximumf>, %0, %cst [1] : vector<8x32xf32> to vector<8xf32>
    %4 = vector.shape_cast %3 : vector<8xf32> to vector<8x1xf32>
    %5 = vector.broadcast %4 : vector<8x1xf32> to vector<8x32xf32>
    %6 = arith.subf %0, %5 : vector<8x32xf32>
    %7 = math.exp %6 : vector<8x32xf32>
    %cst_5 = arith.constant dense<0.000000e+00> : vector<8xf32>
    %8 = vector.multi_reduction <add>, %7, %cst_5 [1] : vector<8x32xf32> to vector<8xf32>
    %9 = vector.shape_cast %8 : vector<8xf32> to vector<8x1xf32>
    %10 = math.log %9 : vector<8x1xf32>
    %11 = arith.addf %4, %10 : vector<8x1xf32>
    %12 = tpu.iota {dimensions = array<i32: 1>} : vector<8x32xi32>
    %13 = vector.broadcast %1 : vector<8x1xi32> to vector<8x32xi32>
    %14 = arith.cmpi eq, %12, %13 : vector<8x32xi32>
    %cst_6 = arith.constant 0.000000e+00 : f32
    %15 = vector.broadcast %cst_6 : f32 to vector<8x32xf32>
    %16 = arith.select %14, %0, %15 : vector<8x32xi1>, vector<8x32xf32>
    %cst_7 = arith.constant dense<0.000000e+00> : vector<8xf32>
    %17 = vector.multi_reduction <add>, %16, %cst_7 [1] : vector<8x32xf32> to vector<8xf32>
    %18 = vector.shape_cast %17 : vector<8xf32> to vector<8x1xf32>
    %19 = arith.subf %11, %18 : vector<8x1xf32>
    %20 = vector.shape_cast %19 : vector<8x1xf32> to vector<1x8x1xf32>
    %cst_8 = arith.constant dense<0.000000e+00> : vector<1xf32>
    %21 = vector.multi_reduction <add>, %20, %cst_8 [1, 2] : vector<1x8x1xf32> to vector<1xf32>
    %22 = vector.shape_cast %21 : vector<1xf32> to vector<1x1x1xf32>
    %23 = vector.extract %22[0, 0, 0] : f32 from vector<1x1x1xf32>
    %24 = arith.subf %0, %2 : vector<8x32xf32>
    %25 = arith.mulf %24, %24 : vector<8x32xf32>
    %26 = vector.shape_cast %25 : vector<8x32xf32> to vector<1x8x32xf32>
    %cst_9 = arith.constant dense<0.000000e+00> : vector<1xf32>
    %27 = vector.multi_reduction <add>, %26, %cst_9 [1, 2] : vector<1x8x32xf32> to vector<1xf32>
    %28 = vector.shape_cast %27 : vector<1xf32> to vector<1x1x1xf32>
    %29 = vector.extract %28[0, 0, 0] : f32 from vector<1x1x1xf32>
    %30 = tpu.iota {dimensions = array<i32: 0>} : vector<8x128xi32>
    %31 = tpu.iota {dimensions = array<i32: 1>} : vector<8x128xi32>
    %c0_i32 = arith.constant 0 : i32
    %32 = vector.broadcast %c0_i32 : i32 to vector<8x128xi32>
    %33 = arith.cmpi eq, %30, %32 : vector<8x128xi32>
    %c0_i32_10 = arith.constant 0 : i32
    %34 = vector.broadcast %c0_i32_10 : i32 to vector<8x128xi32>
    %35 = arith.cmpi eq, %31, %34 : vector<8x128xi32>
    %36 = arith.andi %33, %35 : vector<8x128xi1>
    %c1_i32 = arith.constant 1 : i32
    %37 = vector.broadcast %c1_i32 : i32 to vector<8x128xi32>
    %38 = arith.cmpi eq, %31, %37 : vector<8x128xi32>
    %39 = arith.andi %33, %38 : vector<8x128xi1>
    %cst_11 = arith.constant 0.000000e+00 : f32
    %40 = vector.broadcast %29 : f32 to vector<8x128xf32>
    %41 = vector.broadcast %cst_11 : f32 to vector<8x128xf32>
    %42 = arith.select %39, %40, %41 : vector<8x128xi1>, vector<8x128xf32>
    %43 = vector.broadcast %23 : f32 to vector<8x128xf32>
    %44 = arith.select %36, %43, %42 : vector<8x128xi1>, vector<8x128xf32>
    %45 = vector.shape_cast %44 : vector<8x128xf32> to vector<1x8x128xf32>
    %c0_12 = arith.constant 0 : index
    %c0_13 = arith.constant 0 : index
    %c0_14 = arith.constant 0 : index
    %46 = vector.load %arg4[%c0_12, %c0_13, %c0_14] : memref<1x8x128xf32, #tpu.memory_space<vmem>>, vector<1x8x128xf32>
    tpu.vector_store %arg4[%c0_12, %c0_13, %c0_14], %45 {strides = array<i32>} : memref<1x8x128xf32, #tpu.memory_space<vmem>>, vector<1x8x128xf32>,
    return
  }
  func.func @transform_0(%arg0: i32) -> (i32, i32) {
    %c0_i32 = arith.constant 0 : i32
    %c0_i32_0 = arith.constant 0 : i32
    return %arg0, %c0_i32 : i32, i32
  }
  func.func @transform_1(%arg0: i32) -> (i32, i32) {
    %c0_i32 = arith.constant 0 : i32
    %c0_i32_0 = arith.constant 0 : i32
    return %arg0, %c0_i32 : i32, i32
  }
  func.func @transform_2(%arg0: i32) -> (i32, i32) {
    %c0_i32 = arith.constant 0 : i32
    %c0_i32_0 = arith.constant 0 : i32
    return %arg0, %c0_i32 : i32, i32
  }
  func.func @transform_3(%arg0: i32) -> (i32, i32, i32) {
    %c0_i32 = arith.constant 0 : i32
    %c0_i32_0 = arith.constant 0 : i32
    %c0_i32_1 = arith.constant 0 : i32
    return %arg0, %c0_i32, %c0_i32_0 : i32, i32, i32
  }
}

</mosaic_0001>

<llo_original>
// kernel: tpu_custom_call.1
$region0: #{tpu_custom_call.1}
  #allocation0 [shape = 'u32[]', space=smem, size = 0x4, offset = 0x4, fixed_abs, tag = 'smem constant byte address 0x4 - core index']
  #allocation1 [shape = 'u32[144,128]{1,0:T(1,128)}', space=vmem, size = 0x12000, scoped, tag = 'internal scratch']
  %s0 = inlined_call_operand.vmem [shape: f32[8,32], index: 0, kind: input, shape index: {}]
  %s1 = inlined_call_operand.vmem [shape: s32[8,1], index: 1, kind: input, shape index: {}]
  %s2 = inlined_call_operand.hbm [shape: f32[8,32], index: 2, kind: input, shape index: {}]
  %s3 = inlined_call_operand.hbm [shape: f32[1,8,128], index: 3, kind: output, shape index: {}]
  %s4 = sld [smem:[#allocation0]]
  $region26: #{tpu_custom_call.1} parent=0
    _
  %s6 = ssub.s32 1, %s4
  %s7 = scalar_select 0, %s6, %s4
  $region1: #{tpu_custom_call.1} parent=0
    #allocation2 [shape = 'u8[4096]{0}', space=vmem, size = 0x1000, scoped, tag = 'input window, operand 2, single buffered']
    #allocation3 [shape = 's32[1]{0}', space=sflag, size = 0x4, scoped, tag = 'scoped memory for tpu_custom_call.1']
    #allocation4 [shape = 's32[1]{0}', space=sflag, size = 0x4, scoped, tag = 'scoped memory for tpu_custom_call.1']
    #allocation5 [shape = 'u8[4096]{0}', space=vmem, size = 0x1000, scoped, tag = 'output window, operand 0, single buffered']
    %8 = vsyncpa [#allocation3], 0
    %9 = vsyncpa [#allocation4], 0
    // Predicated region
    $region2: #{tpu_custom_call.1} parent=1 // pred_check
      _
    $region3: #{tpu_custom_call.1} parent=1 // pred_check_branch
      %11 = sbr.rel (0) target = $region5
    $region4: #{tpu_custom_call.1} parent=1 // pred_region
      _
    $region5: #{tpu_custom_call.1} parent=1 // pred_fallthru
      _
    // Predicated region
    $region6: #{tpu_custom_call.1} parent=1 // pred_check
      _
    $region7: #{tpu_custom_call.1} parent=1 // pred_check_branch
      %13 = sbr.rel (0) target = $region9
    $region8: #{tpu_custom_call.1} parent=1 // pred_region
      _
    $region9: #{tpu_custom_call.1} parent=1 // pred_fallthru
      _
    // Predicated region
    $region10: #{tpu_custom_call.1} parent=1 // pred_check
      _
    $region11: #{tpu_custom_call.1} parent=1 // pred_check_branch
      %15 = sbr.rel (0) target = $region13
    $region12: #{tpu_custom_call.1} parent=1 // pred_region
      %s17 = ssub.s32 128, 128
      %18 = vsyncadd [#allocation3], %s17
      %s20 = sshll.u32 [#allocation2], 4
      %s21 = int_to_ptr.vmem [resolvable:$true] %s20
      %23 = dma.hbm_to_vmem [thread:$0]  %s2, 128, %s21, [#allocation3]
    $region13: #{tpu_custom_call.1} parent=1 // pred_fallthru
      _
    // Predicated region
    $region14: #{tpu_custom_call.1} parent=1 // pred_check
      _
    $region15: #{tpu_custom_call.1} parent=1 // pred_check_branch
      %25 = sbr.rel (0) target = $region17
    $region16: #{tpu_custom_call.1} parent=1 // pred_region
      %26 = dma.done [#allocation3], 128
    $region17: #{tpu_custom_call.1} parent=1 // pred_fallthru
      _
    %v27 = vld [vmem:[%s0] sm:$0xff]
    %v28 = vld [vmem:[%s1] sm:$0xff]
    %v29 = vld [vmem:[#allocation2] sm:$0xff]
    %vm30 = vcmask 261120
    %v31 = vsel %vm30, %v27, -inf
    %32 = vmax.xlane.f32.xlu0 %v31
    %v33 = vpop.xlane.xlu0 %32
    %v34 = vsub.f32 %v27, %v33
    %v35 = vmul.f32 %v34, 1.442695
    %v36 = vpow.pop %v35
    %v37 = vsel %vm30, %v36, 0.0
    %38 = vadd.xlane.f32.xlu0 %v37
    %v39 = vpop.xlane.xlu0 %38
    %v40 = vlog2.pop %v39
    %v41 = vmul.f32 %v40, 0.6931472
    %v42 = vadd.f32 %v33, %v41
    %v43 = vlaneseq
    %v44 = vand.u32 %v43, 127
    %45 = vset.pattern.permute.xlu0 0
    %46 = vperm.xlu0 %45, %v28
    %v47 = vpop.permute.xlu0 %46
    %vm48 = vcmp.eq.s32.totalorder %v44, %v47
    %v49 = vsel %vm48, %v27, 0.0
    %v50 = vsel %vm30, %v49, 0.0
    %51 = vadd.xlane.f32.xlu0 %v50
    %v52 = vpop.xlane.xlu0 %51
    %v53 = vsub.f32 %v42, %v52
    %vm54 = vcmask 7168
    %v55 = vsel %vm54, %v53, 0.0
    %56 = vadd.xlane.f32.xlu0 %v55
    %v57 = vpop.xlane.xlu0 %56
    %v58 = vrot.slane %v57, 4
    %v59 = vadd.f32 %v57, %v58
    %v60 = vrot.slane %v59, 2
    %v61 = vadd.f32 %v59, %v60
    %v62 = vrot.slane %v61, 1
    %v63 = vadd.f32 %v61, %v62
    %s64 = vtos %v63
    %v65 = vsub.f32 %v27, %v29
    %v66 = vmul.f32 %v65, %v65
    %v67 = vsel %vm30, %v66, 0.0
    %68 = vadd.xlane.f32.xlu0 %v67
    %v69 = vpop.xlane.xlu0 %68
    %v70 = vrot.slane %v69, 4
    %v71 = vadd.f32 %v69, %v70
    %v72 = vrot.slane %v71, 2
    %v73 = vadd.f32 %v71, %v72
    %v74 = vrot.slane %v73, 1
    %v75 = vadd.f32 %v73, %v74
    %s76 = vtos %v75
    %v77 = vlaneseq
    %v78 = vshrl.u32 %v77, 7
    %vm79 = vcmp.eq.s32.totalorder %v78, 0
    %vm80 = vcmp.eq.s32.totalorder %v44, 0
    %vm81 = vmand %vm79, %vm80
    %vm82 = vcmp.eq.s32.totalorder %v44, 1
    %vm83 = vmand %vm79, %vm82
    %v84 = vstv %s76
    %v85 = vsel %vm83, %v84, 0.0
    %v86 = vstv %s64
    %v87 = vsel %vm81, %v86, %v85
    %88 = vst [vmem:[#allocation5] sm:$0xff] %v87
    // Predicated region
    $region18: #{tpu_custom_call.1} parent=1 // pred_check
      _
    $region19: #{tpu_custom_call.1} parent=1 // pred_check_branch
      %90 = sbr.rel (0) target = $region21
    $region20: #{tpu_custom_call.1} parent=1 // pred_region
      %s92 = ssub.s32 128, 128
      %93 = vsyncadd [#allocation4], %s92
      %s95 = sshll.u32 [#allocation5], 4
      %s96 = int_to_ptr.vmem [resolvable:$true] %s95
      %98 = dma.vmem_to_hbm [thread:$0]  %s96, 128, %s3, [#allocation4]
    $region21: #{tpu_custom_call.1} parent=1 // pred_fallthru
      _
    // Predicated region
    $region22: #{tpu_custom_call.1} parent=1 // pred_check
      _
    $region23: #{tpu_custom_call.1} parent=1 // pred_check_branch
      %100 = sbr.rel (0) target = $region25
    $region24: #{tpu_custom_call.1} parent=1 // pred_region
      %101 = dma.done [#allocation4], 128
    $region25: #{tpu_custom_call.1} parent=1 // pred_fallthru
      _
    %102 = vsyncpa [#allocation3], 1
    %103 = vsyncpa [#allocation4], 1

</llo_original>
